<compile_context>
chip_gen: v6e
topology: v6e:2x2x1
jax: 0.10.0
libtpu: 0.0.40
codegen_flags: <defaults>
</compile_context>

<pallas_src>
import functools

import jax
import jax.numpy as jnp
from jax.experimental import pallas as pl
from jax.experimental.pallas import tpu as pltpu


def _rmsnorm_kernel(x_ref, g_ref, o_ref, *, c_dim: int, eps: float):
    # x_ref: (C, THW)   g_ref: (C, 1) f32   o_ref: (C, THW)
    x = x_ref[...].astype(jnp.float32)                     # (C, THW)

    # sum of squares over the channel (sublane) axis -> (1, THW)
    ss = jnp.sum(x * x, axis=0, keepdims=True)
    # One EUP rsqrt instead of sqrt + f32 divide; eps^2 clamp == F.normalize's
    # max(||x||, eps) except for ||x|| < 1e-12 (numerically negligible).
    inv = jax.lax.rsqrt(jnp.maximum(ss, eps * eps))

    # per-channel scale, hoisted: g * sqrt(C) -> (C, 1), broadcasts over lanes
    scale = g_ref[...] * (c_dim ** 0.5)

    o_ref[...] = (x * inv * scale).astype(o_ref.dtype)


def _pick_hw_tile(hw: int, c: int, itemsize: int, b: int,
                  *, target_bytes: int = 4 << 20,
                  vmem_buffer_budget: int = 24 << 20,
                  min_grid_steps: int = 4) -> int:
    """Byte-based, VMEM-aware lane-tile selection.

    Returns THW (multiple of 128, or == hw) such that:
      * each (C, THW) block is ~target_bytes of input,
      * 4 live buffers (2x in, 2x out) fit in vmem_buffer_budget,
      * b * cdiv(hw, THW) >= min_grid_steps (megacore / pipelining), if possible.
    """
    col_bytes = c * itemsize
    lanes_by_target = max(1, target_bytes // col_bytes)
    lanes_by_vmem = max(1, vmem_buffer_budget // (4 * col_bytes))
    lanes = min(lanes_by_target, lanes_by_vmem)
    lanes = max(128, (lanes // 128) * 128)

    thw = hw if lanes >= hw else lanes       # full extent is always legal

    # Guarantee enough grid steps for both v7x TensorCores / pipelining.
    while b * pl.cdiv(hw, thw) < min_grid_steps and thw > 128:
        new = ((thw // 2) // 128) * 128
        if new < 128:
            break
        thw = new
    return thw


def rmsnorm_pallas(x: jax.Array, g: jax.Array, *, eps: float = 1e-12) -> jax.Array:
    """x: (B, C, H, W), g: (C,) -> (B, C, H, W). Matches PyTorch RMSNorm.forward."""
    assert x.ndim == 4, x.shape
    b, c, h, w = x.shape
    hw = h * w
    itemsize = jnp.dtype(x.dtype).itemsize
    thw = _pick_hw_tile(hw, c, itemsize, b)

    x3 = x.reshape(b, c, hw)
    g2 = g.reshape(c, 1).astype(jnp.float32)   # keep the gain in f32

    grid = (b, pl.cdiv(hw, thw))
    kernel = functools.partial(_rmsnorm_kernel, c_dim=c, eps=eps)

    x_spec = pl.BlockSpec((pl.Squeezed(), c, thw), lambda i, j: (i, 0, j))
    g_spec = pl.BlockSpec((c, 1), lambda i, j: (0, 0))
    o_spec = pl.BlockSpec((pl.Squeezed(), c, thw), lambda i, j: (i, 0, j))

    out3 = pl.pallas_call(
        kernel,
        out_shape=jax.ShapeDtypeStruct((b, c, hw), x.dtype),
        grid_spec=pl.GridSpec(
            grid=grid,
            in_specs=[x_spec, g_spec],
            out_specs=o_spec,
        ),
        compiler_params=pltpu.CompilerParams(
            dimension_semantics=("parallel", "parallel"),
            vmem_limit_bytes=32 << 20,   # covers 4 buffers <= 24 MiB on all of v5e/v6e/v7x
        ),
        cost_estimate=pl.CostEstimate(
            flops=4 * b * c * hw,
            transcendentals=b * hw,                       # one rsqrt per spatial position
            bytes_accessed=2 * b * c * hw * itemsize + c * 4,
        ),
    )(x3, g2)

    return out3.reshape(b, c, h, w)


def prenorm(x: jax.Array, g: jax.Array, fn=lambda y: y, *, eps: float = 1e-12) -> jax.Array:
    """PreNorm.forward: fn(RMSNorm(x)).

    TODO(synk): `fn` is an arbitrary wrapped submodule in the PyTorch spec; it is
    applied here as a plain JAX callable after the fused RMSNorm kernel (identity
    in the demo). Fusing fn's elementwise prologue / first matmul into the
    kernel epilogue would remove one full HBM round-trip of the activation.
    """
    return fn(rmsnorm_pallas(x, g, eps=eps))


def _reference(x: jax.Array, g: jax.Array, eps: float = 1e-12) -> jax.Array:
    # Pure-JAX mirror of the PyTorch forward (fn = identity).
    c = x.shape[1]
    norm = jnp.sqrt(jnp.sum(x.astype(jnp.float32) ** 2, axis=1, keepdims=True))
    xn = x / jnp.maximum(norm, eps)
    return xn * g.reshape(1, c, 1, 1) * (c ** 0.5)


if __name__ == "__main__":
    key = jax.random.PRNGKey(0)
    kx, kg = jax.random.split(key)

    B, C, H, W = 2, 4, 16, 16
    x = jax.random.normal(kx, (B, C, H, W), dtype=jnp.float32)
    # PyTorch initializes g to ones; use random g for a stronger correctness check.
    g = 1.0 + 0.1 * jax.random.normal(kg, (C,), dtype=jnp.float32)

    out = prenorm(x, g)              # fn = identity
    out = jax.block_until_ready(out)

    ref = _reference(x, g)
    assert out.shape == (B, C, H, W), out.shape
    err = float(jnp.max(jnp.abs(out - ref)))
    assert jnp.allclose(out, ref, atol=1e-5, rtol=1e-5), err

    print("KERNEL_OK")
</pallas_src>

<mosaic_0001>
module attributes {stable_mosaic.version = 11 : i64} {
  func.func @_rmsnorm_kernel(%arg0: i32, %arg1: i32, %arg2: memref<1x4x128xf32, #tpu.memory_space<vmem>>, %arg3: memref<4x1xf32, #tpu.memory_space<vmem>>, %arg4: memref<1x4x128xf32, #tpu.memory_space<vmem>>) attributes {dimension_semantics = [#tpu.dimension_semantics<parallel>, #tpu.dimension_semantics<parallel>], iteration_bounds = array<i64: 2, 2>, scalar_prefetch = 0 : i64, scratch_operands = 0 : i64, tpu.core_type = #tpu.core_type<tc>, window_params = [{transform_indices = @transform_0, window_bounds = array<i64: 1, 4, 128>}, {pipeline_mode = #tpu.pipeline_mode<synchronous>, transform_indices = @transform_1, window_bounds = array<i64: 4, 1>}, {transform_indices = @transform_2, window_bounds = array<i64: 1, 4, 128>}]} {
    %c0 = arith.constant 0 : index
    %c0_0 = arith.constant 0 : index
    %c0_1 = arith.constant 0 : index
    %0 = vector.load %arg2[%c0, %c0_0, %c0_1] : memref<1x4x128xf32, #tpu.memory_space<vmem>>, vector<1x4x128xf32>
    %1 = vector.shape_cast %0 : vector<1x4x128xf32> to vector<4x128xf32>
    %2 = arith.mulf %1, %1 : vector<4x128xf32>
    %cst = arith.constant dense<0.000000e+00> : vector<128xf32>
    %3 = vector.multi_reduction <add>, %2, %cst [0] : vector<4x128xf32> to vector<128xf32>
    %4 = vector.shape_cast %3 : vector<128xf32> to vector<1x128xf32>
    %cst_2 = arith.constant 1.000000e-24 : f32
    %5 = vector.broadcast %cst_2 : f32 to vector<1x128xf32>
    %6 = arith.maximumf %4, %5 : vector<1x128xf32>
    %7 = math.rsqrt %6 : vector<1x128xf32>
    %c0_3 = arith.constant 0 : index
    %c0_4 = arith.constant 0 : index
    %8 = vector.load %arg3[%c0_3, %c0_4] : memref<4x1xf32, #tpu.memory_space<vmem>>, vector<4x1xf32>
    %cst_5 = arith.constant 2.000000e+00 : f32
    %9 = vector.broadcast %cst_5 : f32 to vector<4x1xf32>
    %10 = arith.mulf %8, %9 : vector<4x1xf32>
    %11 = vector.broadcast %7 : vector<1x128xf32> to vector<4x128xf32>
    %12 = arith.mulf %1, %11 : vector<4x128xf32>
    %13 = vector.broadcast %10 : vector<4x1xf32> to vector<4x128xf32>
    %14 = arith.mulf %12, %13 : vector<4x128xf32>
    %c0_6 = arith.constant 0 : index
    %c0_7 = arith.constant 0 : index
    %c0_8 = arith.constant 0 : index
    %15 = vector.load %arg4[%c0_6, %c0_7, %c0_8] : memref<1x4x128xf32, #tpu.memory_space<vmem>>, vector<1x4x128xf32>
    %16 = vector.shape_cast %15 : vector<1x4x128xf32> to vector<4x128xf32>
    %17 = vector.shape_cast %14 : vector<4x128xf32> to vector<1x4x128xf32>
    tpu.vector_store %arg4[%c0_6, %c0_7, %c0_8], %17 {strides = array<i32>} : memref<1x4x128xf32, #tpu.memory_space<vmem>>, vector<1x4x128xf32>,
    return
  }
  func.func @transform_0(%arg0: i32, %arg1: i32) -> (i32, i32, i32) {
    %c0_i32 = arith.constant 0 : i32
    %c0_i32_0 = arith.constant 0 : i32
    return %arg0, %c0_i32, %arg1 : i32, i32, i32
  }
  func.func @transform_1(%arg0: i32, %arg1: i32) -> (i32, i32) {
    %c0_i32 = arith.constant 0 : i32
    %c0_i32_0 = arith.constant 0 : i32
    %c0_i32_1 = arith.constant 0 : i32
    return %c0_i32, %c0_i32_0 : i32, i32
  }
  func.func @transform_2(%arg0: i32, %arg1: i32) -> (i32, i32, i32) {
    %c0_i32 = arith.constant 0 : i32
    %c0_i32_0 = arith.constant 0 : i32
    return %arg0, %c0_i32, %arg1 : i32, i32, i32
  }
}

</mosaic_0001>

<llo_original>
// kernel: tpu_custom_call.1
$region0: #{tpu_custom_call.1}
  #allocation0 [shape = 'u32[]', space=smem, size = 0x4, offset = 0x4, fixed_abs, tag = 'smem constant byte address 0x4 - core index']
  #allocation1 [shape = 'u32[144,128]{1,0:T(1,128)}', space=vmem, size = 0x12000, scoped, tag = 'internal scratch']
  %s0 = inlined_call_operand.hbm [shape: f32[2,4,256], index: 0, kind: input, shape index: {}]
  %s1 = inlined_call_operand.vmem [shape: f32[4,1], index: 1, kind: input, shape index: {}]
  %s2 = inlined_call_operand.hbm [shape: f32[2,4,256], index: 2, kind: output, shape index: {}]
  %s3 = sld [smem:[#allocation0]]
  $region45: #{tpu_custom_call.1} parent=0
    _
  %s5 = ssub.s32 1, %s3
  %s6 = scalar_select 0, %s5, %s3
  $region1: #{tpu_custom_call.1} parent=0
    #allocation2 [shape = 'u8[4096]{0}', space=vmem, size = 0x1000, scoped, tag = 'input window, operand 0']
    #allocation3 [shape = 's32[2]{0}', space=sflag, size = 0x8, scoped, tag = 'scoped memory for tpu_custom_call.1']
    #allocation4 [shape = 's32[2]{0}', space=sflag, size = 0x8, scoped, tag = 'scoped memory for tpu_custom_call.1']
    #allocation5 [shape = 'u8[4096]{0}', space=vmem, size = 0x1000, scoped, tag = 'output window, operand 0']
    %7 = vsyncpa [#allocation3], 0
    %s8 = scalar_lea.sflag [#allocation3], 1
    %9 = vsyncpa %s8, 0
    %10 = vsyncpa [#allocation4], 0
    %s11 = scalar_lea.sflag [#allocation4], 1
    %12 = vsyncpa %s11, 0
    loop: start=0, step=1, limit=6
    $region2: #{tpu_custom_call.1} parent=1 // loop_pre_header
      _
    $region3: #{tpu_custom_call.1} parent=1 // loop_header
      %s14 = sphi 0, %s18
      %p15 = scmp.ge.s32.totalorder %s14, 6
      %s21 = sphi 0, %s33
      %s22 = sphi 0, %s29
      %s23 = sphi 0, %s21
      %s24 = sphi 0, %s22
      %s25 = sphi 0, %s23
      %s26 = sphi 0, %s24
      %s38 = sphi 0, %s40
      %s41 = sphi 0, %s38
      %s42 = sphi 0, %s41
      %s58 = sphi 0, %s42
      %s62 = sphi 0, %s62
      %s64 = sphi 0, %s62
      %s65 = sphi 0, %s64
      %s79 = sphi 0, %s65
      %s87 = sphi 0, %s89
      %s90 = sphi 0, %s87
      %s91 = sphi 0, %s90
      %s107 = sphi 0, %s91
    $region4: #{tpu_custom_call.1} parent=1 // loop_header_branch
      %17 = sbr.rel (%p15) target = $region8
    $region5: #{tpu_custom_call.1} parent=1 // loop_body
      %s19 = ssub.s32 %s14, 1
      %s20 = ssub.s32 %s14, 2
      %s27 = sadd.s32 1, %s22
      %p28 = scmp.ge.s32.totalorder %s27, 2
      %s29 = scalar_select %p28, 0, %s27
      %s30 = sadd.s32 1, %s21
      %s31 = scalar_select %p28, %s30, %s21
      %p32 = scmp.ge.s32.totalorder %s31, 2
      %s33 = scalar_select %p32, 0, %s31
      %s34 = ssub.s32 %s21, %s33
      %s35 = ssub.s32 %s22, %s29
      %s36 = sor.u32 %s34, %s35
      %p37 = scmp.eq.s32.totalorder %s36, 0
      %s39 = sadd.s32 %s38, 1
      %s40 = scalar_select %p37, %s38, %s39
      %p43 = pneg %p37
      %p44 = scmp.eq.s32.totalorder %s14, 3
      %p45 = por %p43, %p44
      %p46 = scmp.ne.s32.totalorder %s38, %s41
      %p47 = scmp.eq.s32.totalorder %s14, 0
      %p48 = por %p46, %p47
      %p49 = scmp.ne.s32.totalorder %s38, %s41
      %p50 = scmp.eq.s32.totalorder %s19, 3
      %p51 = por %p49, %p50
      %p52 = scmp.ne.s32.totalorder %s41, %s42
      %p53 = scmp.eq.s32.totalorder %s19, 0
      %p54 = por %p52, %p53
      %p55 = scmp.ne.s32.totalorder %s41, %s42
      %p56 = scmp.eq.s32.totalorder %s20, 3
      %p57 = por %p55, %p56
      %p59 = scmp.ne.s32.totalorder %s42, %s58
      %p60 = scmp.eq.s32.totalorder %s20, 0
      %p61 = por %p59, %p60
      %s63 = sadd.s32 %s62, 1
      %p66 = scmp.eq.s32.totalorder %s14, 3
      %p67 = scmp.ne.s32.totalorder %s62, %s64
      %p68 = scmp.eq.s32.totalorder %s14, 0
      %p69 = por %p67, %p68
      %p70 = scmp.ne.s32.totalorder %s62, %s64
      %p71 = scmp.eq.s32.totalorder %s19, 3
      %p72 = por %p70, %p71
      %p73 = scmp.ne.s32.totalorder %s64, %s65
      %p74 = scmp.eq.s32.totalorder %s19, 0
      %p75 = por %p73, %p74
      %p76 = scmp.ne.s32.totalorder %s64, %s65
      %p77 = scmp.eq.s32.totalorder %s20, 3
      %p78 = por %p76, %p77
      %p80 = scmp.ne.s32.totalorder %s65, %s79
      %p81 = scmp.eq.s32.totalorder %s20, 0
      %p82 = por %p80, %p81
      %s83 = ssub.s32 %s21, %s33
      %s84 = ssub.s32 %s22, %s29
      %s85 = sor.u32 %s83, %s84
      %p86 = scmp.eq.s32.totalorder %s85, 0
      %s88 = sadd.s32 %s87, 1
      %s89 = scalar_select %p86, %s87, %s88
      %p92 = pneg %p86
      %p93 = scmp.eq.s32.totalorder %s14, 3
      %p94 = por %p92, %p93
      %p95 = scmp.ne.s32.totalorder %s87, %s90
      %p96 = scmp.eq.s32.totalorder %s14, 0
      %p97 = por %p95, %p96
      %p98 = scmp.ne.s32.totalorder %s87, %s90
      %p99 = scmp.eq.s32.totalorder %s19, 3
      %p100 = por %p98, %p99
      %p101 = scmp.ne.s32.totalorder %s90, %s91
      %p102 = scmp.eq.s32.totalorder %s19, 0
      %p103 = por %p101, %p102
      %p104 = scmp.ne.s32.totalorder %s90, %s91
      %p105 = scmp.eq.s32.totalorder %s20, 3
      %p106 = por %p104, %p105
      %p108 = scmp.ne.s32.totalorder %s91, %s107
      %p109 = scmp.eq.s32.totalorder %s20, 0
      %p110 = por %p108, %p109
      %p111 = scmp.le.s32.totalorder 1, %s14
      %p112 = scmp.lt.s32.totalorder %s14, 5
      %p113 = pnand %p111, %p112
      %p114 = pneg %p113
      // Predicated region
      $region9: #{tpu_custom_call.1} parent=5 // pred_check
        _
      $region10: #{tpu_custom_call.1} parent=5 // pred_check_branch
        %116 = sbr.rel (%p113) target = $region12
      $region11: #{tpu_custom_call.1} parent=5 // pred_region
        %s117 = ssub.s32 %s14, 1
        // Predicated region
        $region13: #{tpu_custom_call.1} parent=11 // pred_check
          %p118 = pneg %p75
        $region14: #{tpu_custom_call.1} parent=11 // pred_check_branch
          %120 = sbr.rel (%p118) target = $region16
        $region15: #{tpu_custom_call.1} parent=11 // pred_region
          _
        $region16: #{tpu_custom_call.1} parent=11 // pred_fallthru
          _
      $region12: #{tpu_custom_call.1} parent=5 // pred_fallthru
        _
      %p121 = scmp.lt.s32.totalorder %s14, 4
      // Predicated region
      $region17: #{tpu_custom_call.1} parent=5 // pred_check
        %p122 = pneg %p121
      $region18: #{tpu_custom_call.1} parent=5 // pred_check_branch
        %124 = sbr.rel (%p122) target = $region20
      $region19: #{tpu_custom_call.1} parent=5 // pred_region
        // Predicated region
        $region21: #{tpu_custom_call.1} parent=19 // pred_check
          %p125 = pneg %p48
        $region22: #{tpu_custom_call.1} parent=19 // pred_check_branch
          %127 = sbr.rel (%p125) target = $region24
        $region23: #{tpu_custom_call.1} parent=19 // pred_region
          %s128 = sand.u32 %s38, 1
          %s129 = scalar_lea.sflag [#allocation3], %s128
          %s130 = sand.u32 %s38, 1
          %s131 = smul.addr %s130, 4
          %s132 = scalar_lea.vmem [#allocation2], %s131
          %s134 = ssub.s32 64, 64
          %135 = vsyncadd %s129, %s134
          %s136 = smul.addr %s21, 2
          %s137 = sadd.s32 %s22, %s136
          %s138 = smul.addr %s137, 64
          %s139 = scalar_lea.hbm %s0, %s138
          %s141 = sshll.u32 %s132, 4
          %s142 = int_to_ptr.vmem [resolvable:$true] %s141
          %144 = dma.hbm_to_vmem [thread:$0]  %s139, 64, %s142, %s129
        $region24: #{tpu_custom_call.1} parent=19 // pred_fallthru
          _
      $region20: #{tpu_custom_call.1} parent=5 // pred_fallthru
        _
      %p145 = scmp.le.s32.totalorder 1, %s14
      %p146 = scmp.lt.s32.totalorder %s14, 5
      %p147 = pnand %p145, %p146
      %p148 = pneg %p147
      // Predicated region
      $region25: #{tpu_custom_call.1} parent=5 // pred_check
        _
      $region26: #{tpu_custom_call.1} parent=5 // pred_check_branch
        %150 = sbr.rel (%p147) target = $region28
      $region27: #{tpu_custom_call.1} parent=5 // pred_region
        %s151 = ssub.s32 %s14, 1
        %s152 = sand.u32 %s41, 1
        %s153 = scalar_lea.sflag [#allocation3], %s152
        %s154 = sand.u32 %s41, 1
        %s155 = smul.addr %s154, 4
        %s156 = scalar_lea.vmem [#allocation2], %s155
        // Predicated region
        $region29: #{tpu_custom_call.1} parent=27 // pred_check
          %p157 = pneg %p54
        $region30: #{tpu_custom_call.1} parent=27 // pred_check_branch
          %159 = sbr.rel (%p157) target = $region32
        $region31: #{tpu_custom_call.1} parent=27 // pred_region
          %160 = dma.done %s153, 64
        $region32: #{tpu_custom_call.1} parent=27 // pred_fallthru
          _
        %s161 = sand.u32 %s41, 1
        %s162 = scalar_lea.sflag [#allocation3], %s161
        %s163 = sand.u32 %s41, 1
        %s164 = smul.addr %s163, 4
        %s165 = scalar_lea.vmem [#allocation2], %s164
        %p166 = pneg %p54
        %p167 = pneg %p51
        %p168 = pneg %p75
        %p169 = pneg %p72
        %p170 = pneg %p103
        %p171 = pneg %p100
        %s172 = sand.u32 %s90, 1
        %s173 = scalar_lea.sflag [#allocation4], %s172
        %s174 = sand.u32 %s90, 1
        %s175 = smul.addr %s174, 4
        %s176 = scalar_lea.vmem [#allocation5], %s175
        %v177 = vld [vmem:[%s156] sm:$0xf]
        %v178 = vmul.f32 %v177, %v177
        %vm179 = vcmask 1043456
        %v180 = vsel %vm179, %v178, 0.0
        %v181 = vrot.slane %v180, 4
        %v182 = vadd.f32 %v180, %v181
        %v183 = vrot.slane %v182, 2
        %v184 = vadd.f32 %v182, %v183
        %v185 = vrot.slane %v184, 1
        %v186 = vadd.f32 %v184, %v185
        %v187 = vmax.f32 %v186, 1e-24
        %v188 = vrsqrt.pop %v187
        %v189 = vld [vmem:[%s1] sm:$0xf]
        %v190 = vmul.f32 %v189, 2.0
        %v191 = vmul.f32 %v177, %v188
        %193 = vset.pattern.permute.xlu0 0
        %194 = vperm.xlu0 %193, %v190
        %v195 = vpop.permute.xlu0 %194
        %v197 = vmul.f32 %v191, %v195
        %198 = vst [vmem:[%s176] sm:$0xf] %v197
        %s199 = sand.u32 %s90, 1
        %s200 = scalar_lea.sflag [#allocation4], %s199
        %s201 = sand.u32 %s90, 1
        %s202 = smul.addr %s201, 4
        %s203 = scalar_lea.vmem [#allocation5], %s202
        // Predicated region
        $region33: #{tpu_custom_call.1} parent=27 // pred_check
          %p204 = pneg %p100
        $region34: #{tpu_custom_call.1} parent=27 // pred_check_branch
          %206 = sbr.rel (%p204) target = $region36
        $region35: #{tpu_custom_call.1} parent=27 // pred_region
          %s208 = ssub.s32 64, 64
          %209 = vsyncadd %s200, %s208
          %s210 = smul.addr %s23, 2
          %s211 = sadd.s32 %s24, %s210
          %s212 = smul.addr %s211, 64
          %s213 = scalar_lea.hbm %s2, %s212
          %s215 = sshll.u32 %s203, 4
          %s216 = int_to_ptr.vmem [resolvable:$true] %s215
          %218 = dma.vmem_to_hbm [thread:$0]  %s216, 64, %s213, %s200
        $region36: #{tpu_custom_call.1} parent=27 // pred_fallthru
          _
      $region28: #{tpu_custom_call.1} parent=5 // pred_fallthru
        _
      %p219 = scmp.le.s32.totalorder 2, %s14
      // Predicated region
      $region37: #{tpu_custom_call.1} parent=5 // pred_check
        %p220 = pneg %p219
      $region38: #{tpu_custom_call.1} parent=5 // pred_check_branch
        %222 = sbr.rel (%p220) target = $region40
      $region39: #{tpu_custom_call.1} parent=5 // pred_region
        %s223 = ssub.s32 %s14, 2
        // Predicated region
        $region41: #{tpu_custom_call.1} parent=39 // pred_check
          %p224 = pneg %p106
        $region42: #{tpu_custom_call.1} parent=39 // pred_check_branch
          %226 = sbr.rel (%p224) target = $region44
        $region43: #{tpu_custom_call.1} parent=39 // pred_region
          %s227 = sand.u32 %s91, 1
          %s228 = scalar_lea.sflag [#allocation4], %s227
          %s229 = sand.u32 %s91, 1
          %s230 = smul.addr %s229, 4
          %s231 = scalar_lea.vmem [#allocation5], %s230
          %232 = dma.done %s228, 64
        $region44: #{tpu_custom_call.1} parent=39 // pred_fallthru
          _
      $region40: #{tpu_custom_call.1} parent=5 // pred_fallthru
        _
    $region6: #{tpu_custom_call.1} parent=1 // loop_footer
      %s18 = sadd.s32 1, %s14
    $region7: #{tpu_custom_call.1} parent=1 // loop_footer_branch
      %13 = sbr.rel target = $region3
    $region8: #{tpu_custom_call.1} parent=1 // loop_exit
      _
    %233 = vsyncpa [#allocation3], 1
    %s234 = scalar_lea.sflag [#allocation3], 1
    %235 = vsyncpa %s234, 1
    %236 = vsyncpa [#allocation4], 1
    %s237 = scalar_lea.sflag [#allocation4], 1
    %238 = vsyncpa %s237, 1

</llo_original>
